<compile_context>
chip_gen: v7x
topology: tpu7x:2x2x1
jax: 0.10.0
libtpu: 0.0.40
codegen_flags: <defaults>
</compile_context>

<pallas_src>
import functools

import jax
import jax.numpy as jnp
import numpy as np
from jax import lax
from jax.experimental import pallas as pl
from jax.experimental.pallas import tpu as pltpu


def _round_up(x: int, m: int) -> int:
    return ((x + m - 1) // m) * m


def _matmul_bias_kernel(cols_ref, w_ref, b_ref, o_ref):
    # cols_ref: (tile_m, K) bf16, w_ref: (K, C_out) bf16 (VMEM-resident),
    # b_ref: (1, C_out) f32, o_ref: (tile_m, C_out) out dtype.
    # bf16 MXU matmul with f32 accumulation, fused f32 bias add.
    acc = jnp.dot(cols_ref[...], w_ref[...], preferred_element_type=jnp.float32)
    o_ref[...] = (acc + b_ref[...]).astype(o_ref.dtype)


def _vmem_ceiling_bytes() -> int:
    """Per-generation ceiling for vmem_limit_bytes (headroom below physical)."""
    try:
        info_fn = getattr(pltpu, "get_tpu_info", None)
        if info_fn is not None:
            cap = getattr(info_fn(), "vmem_capacity_bytes", None)
            if cap:
                return max(32 << 20, int(cap) - (16 << 20))
    except Exception:
        pass
    return 48 << 20   # safe on v5e/v6e (128 MiB phys) and v7x (64 MiB phys)


def _choose_tile_m(M, K, C_out, *, cols_itemsize, out_itemsize, weight_bytes,
                   budget_bytes=24 << 20, cap=2048):
    """Pick the M tile: a multiple of 16 (bf16 sublane packing), as large as
    the VMEM budget allows (cap 2048 to amortize the ~0.35us grid-step
    overhead), preferring an exact divisor of M so no M padding / post-slice
    is needed.  Returns (tile_m, M_pad)."""
    per_row = 2 * (K * cols_itemsize + C_out * out_itemsize)   # 2-deep pipeline
    fit = max(16, ((budget_bytes - weight_bytes) // per_row // 16) * 16)
    cap = max(16, min(cap, fit, _round_up(M, 16)))
    best = 0
    for d in range(16, cap + 1, 16):
        if M % d == 0:
            best = d
    if best:
        return best, M                       # exact tiling, no padding
    return cap, _round_up(M, cap)


@functools.partial(jax.jit,
                   static_argnames=("kernel", "stride", "padding",
                                    "compute_dtype"))
def _patch_embed_core(x, weight, bias, *, kernel, stride, padding,
                      compute_dtype):
    N, C_in, H, W = x.shape
    C_out = weight.shape[0]
    KH, KW = kernel
    SH, SW = stride
    PH, PW = padding
    K = C_in * KH * KW
    Ho = (H + 2 * PH - KH) // SH + 1
    Wo = (W + 2 * PW - KW) // SW + 1
    M = N * Wo * Ho
    out_dtype = x.dtype

    # Slice-based patch extraction (no XLA gather).  The "NWHC" out-spec puts
    # spatial W before H and the patch channels (ordered c, kh, kw -- matching
    # weight.reshape(C_out, C_in*KH*KW)) last, i.e. rows come out directly in
    # the transpose(1, 3) ordering needed by the module.
    patches = lax.conv_general_dilated_patches(
        x.astype(compute_dtype),
        filter_shape=(KH, KW),
        window_strides=(SH, SW),
        padding=[(PH, PH), (PW, PW)],
        dimension_numbers=("NCHW", "OIHW", "NWHC"),
    )                                        # (N, Wo, Ho, C_in*KH*KW)
    cols = patches.reshape(M, K)             # rows in (n, wo, ho) order

    w_mat = weight.reshape(C_out, K).T.astype(compute_dtype)   # (K, C_out)
    b_mat = bias.reshape(1, C_out).astype(jnp.float32)         # f32 bias

    cols_isz = cols.dtype.itemsize
    out_isz = jnp.dtype(out_dtype).itemsize
    weight_bytes = 2 * K * C_out * w_mat.dtype.itemsize + 2 * C_out * 4
    tile_m, M_pad = _choose_tile_m(M, K, C_out,
                                   cols_itemsize=cols_isz,
                                   out_itemsize=out_isz,
                                   weight_bytes=weight_bytes)
    if M_pad != M:                           # rare path (M has no /16 divisor)
        cols = jnp.pad(cols, ((0, M_pad - M), (0, 0)))

    grid = (M_pad // tile_m,)

    est_vmem = (2 * tile_m * K * cols_isz          # cols, double-buffered
                + 2 * tile_m * C_out * out_isz     # out, double-buffered
                + weight_bytes)                    # resident weight + bias
    cp_kwargs = dict(dimension_semantics=("parallel",))
    if est_vmem > (12 << 20):
        cp_kwargs["vmem_limit_bytes"] = int(
            min(est_vmem * 5 // 4 + (2 << 20), _vmem_ceiling_bytes()))

    out_flat = pl.pallas_call(
        _matmul_bias_kernel,
        out_shape=jax.ShapeDtypeStruct((M_pad, C_out), out_dtype),
        grid=grid,
        in_specs=[
            pl.BlockSpec((tile_m, K), lambda i: (i, 0)),     # cols tile
            pl.BlockSpec((K, C_out), lambda i: (0, 0)),      # weight (resident)
            pl.BlockSpec((1, C_out), lambda i: (0, 0)),      # bias   (resident)
        ],
        out_specs=pl.BlockSpec((tile_m, C_out), lambda i: (i, 0)),
        compiler_params=pltpu.CompilerParams(**cp_kwargs),
        cost_estimate=pl.CostEstimate(
            flops=2 * M_pad * K * C_out,
            transcendentals=0,
            bytes_accessed=(M_pad * K * cols_isz
                            + K * C_out * w_mat.dtype.itemsize
                            + C_out * 4
                            + M_pad * C_out * out_isz)),
    )(cols, w_mat, b_mat)

    if M_pad != M:
        out_flat = out_flat[:M]
    # Rows were produced in (n, wo, ho) order -> this is transpose(1,3)
    # already; on the common path this reshape is a free metadata op.
    return out_flat.reshape(N, Wo, Ho, C_out)


def patch_embed_forward(x_nchw, weight, bias, *, kernel=(7, 7), stride=(4, 4),
                        padding=(3, 3), compute_dtype=jnp.bfloat16):
    """Forward pass equivalent to PatchEmbed.forward.

    x_nchw : (N, C_in, H, W)
    weight : (C_out, C_in, KH, KW)  (PyTorch Conv2d layout)
    bias   : (C_out,)
    Returns (y_transposed, conv_shape) with
      y_transposed: (N, W_out, H_out, C_out)   [== conv(x).transpose(1, 3)]
      conv_shape  : (N, C_out, H_out, W_out)
    """
    y = _patch_embed_core(x_nchw, weight, bias,
                          kernel=tuple(kernel), stride=tuple(stride),
                          padding=tuple(padding), compute_dtype=compute_dtype)
    N, _, H, W = x_nchw.shape
    C_out = weight.shape[0]
    Ho = (H + 2 * padding[0] - kernel[0]) // stride[0] + 1
    Wo = (W + 2 * padding[1] - kernel[1]) // stride[1] + 1
    conv_shape = (N, C_out, Ho, Wo)
    return y, conv_shape


def _reference_conv(x_nchw, weight, bias, stride, padding):
    y = lax.conv_general_dilated(
        x_nchw, weight,
        window_strides=stride,
        padding=[(padding[0], padding[0]), (padding[1], padding[1])],
        dimension_numbers=("NCHW", "OIHW", "NCHW"),
    )
    return y + bias[None, :, None, None]


if __name__ == "__main__":
    # Small shapes consistent with the module (scaled down).
    N, C_in, H, W = 2, 4, 16, 16
    C_out = 32
    kernel, stride, padding = (7, 7), (4, 4), (3, 3)

    key = jax.random.PRNGKey(0)
    kx, kw, kb = jax.random.split(key, 3)
    x = jax.random.normal(kx, (N, C_in, H, W), dtype=jnp.float32)
    fan_in = C_in * kernel[0] * kernel[1]
    weight = jax.random.normal(kw, (C_out, C_in, kernel[0], kernel[1]),
                               dtype=jnp.float32) * (1.0 / np.sqrt(fan_in))
    bias = jax.random.normal(kb, (C_out,), dtype=jnp.float32) * 0.02

    y, shape_out = patch_embed_forward(x, weight, bias,
                                       kernel=kernel, stride=stride,
                                       padding=padding)
    y = jax.block_until_ready(y)

    # Verify against a plain-JAX f32 conv reference (PyTorch Conv2d
    # semantics).  Tolerances account for the bf16 MXU inputs (f32 accum).
    ref = _reference_conv(x, weight, bias, stride, padding)   # (N, C_out, Ho, Wo)
    ref_t = jnp.transpose(ref, (0, 3, 2, 1))                  # transpose(1, 3)
    assert shape_out == tuple(ref.shape), (shape_out, ref.shape)
    assert y.shape == ref_t.shape, (y.shape, ref_t.shape)
    np.testing.assert_allclose(np.asarray(y, dtype=np.float32),
                               np.asarray(ref_t),
                               rtol=5e-2, atol=5e-2)

    print("KERNEL_OK")
</pallas_src>

<mosaic_0001>
module attributes {stable_mosaic.version = 11 : i64} {
  func.func @_matmul_bias_kernel(%arg0: i32, %arg1: memref<32x196xbf16, #tpu.memory_space<vmem>>, %arg2: memref<196x32xbf16, #tpu.memory_space<vmem>>, %arg3: memref<1x32xf32, #tpu.memory_space<vmem>>, %arg4: memref<32x32xf32, #tpu.memory_space<vmem>>) attributes {dimension_semantics = [#tpu.dimension_semantics<parallel>], iteration_bounds = array<i64: 1>, scalar_prefetch = 0 : i64, scratch_operands = 0 : i64, tpu.core_type = #tpu.core_type<tc>, window_params = [{transform_indices = @transform_0, window_bounds = array<i64: 32, 196>}, {pipeline_mode = #tpu.pipeline_mode<synchronous>, transform_indices = @transform_1, window_bounds = array<i64: 196, 32>}, {pipeline_mode = #tpu.pipeline_mode<synchronous>, transform_indices = @transform_2, window_bounds = array<i64: 1, 32>}, {transform_indices = @transform_3, window_bounds = array<i64: 32, 32>}]} {
    %c0 = arith.constant 0 : index
    %c0_0 = arith.constant 0 : index
    %0 = vector.load %arg1[%c0, %c0_0] : memref<32x196xbf16, #tpu.memory_space<vmem>>, vector<32x196xbf16>
    %c0_1 = arith.constant 0 : index
    %c0_2 = arith.constant 0 : index
    %1 = vector.load %arg2[%c0_1, %c0_2] : memref<196x32xbf16, #tpu.memory_space<vmem>>, vector<196x32xbf16>
    %cst = arith.constant dense<0.000000e+00> : vector<32x32xf32>
    %2 = tpu.matmul %0, %1, %cst {dimension_numbers = #tpu.dot_dimension_numbers<[1], [0], [0], [1], [0, 0, 1, 1], [], []>} : vector<32x196xbf16>, vector<196x32xbf16>, vector<32x32xf32> -> vector<32x32xf32>
    %c0_3 = arith.constant 0 : index
    %c0_4 = arith.constant 0 : index
    %3 = vector.load %arg3[%c0_3, %c0_4] : memref<1x32xf32, #tpu.memory_space<vmem>>, vector<1x32xf32>
    %4 = vector.broadcast %3 : vector<1x32xf32> to vector<32x32xf32>
    %5 = arith.addf %2, %4 : vector<32x32xf32>
    %c0_5 = arith.constant 0 : index
    %c0_6 = arith.constant 0 : index
    %6 = vector.load %arg4[%c0_5, %c0_6] : memref<32x32xf32, #tpu.memory_space<vmem>>, vector<32x32xf32>
    tpu.vector_store %arg4[%c0_5, %c0_6], %5 {strides = array<i32>} : memref<32x32xf32, #tpu.memory_space<vmem>>, vector<32x32xf32>,
    return
  }
  func.func @transform_0(%arg0: i32) -> (i32, i32) {
    %c0_i32 = arith.constant 0 : i32
    %c0_i32_0 = arith.constant 0 : i32
    return %arg0, %c0_i32 : i32, i32
  }
  func.func @transform_1(%arg0: i32) -> (i32, i32) {
    %c0_i32 = arith.constant 0 : i32
    %c0_i32_0 = arith.constant 0 : i32
    %c0_i32_1 = arith.constant 0 : i32
    return %c0_i32, %c0_i32_0 : i32, i32
  }
  func.func @transform_2(%arg0: i32) -> (i32, i32) {
    %c0_i32 = arith.constant 0 : i32
    %c0_i32_0 = arith.constant 0 : i32
    %c0_i32_1 = arith.constant 0 : i32
    return %c0_i32, %c0_i32_0 : i32, i32
  }
  func.func @transform_3(%arg0: i32) -> (i32, i32) {
    %c0_i32 = arith.constant 0 : i32
    %c0_i32_0 = arith.constant 0 : i32
    return %arg0, %c0_i32 : i32, i32
  }
}

</mosaic_0001>

<llo_original>
// kernel: _patch_embed_core.1
$region0: #{_patch_embed_core.1}
  #allocation0 [shape = 'u32[]', space=smem, size = 0x4, offset = 0x4, fixed_abs, tag = 'smem constant byte address 0x4 - core index']
  #allocation1 [shape = 'u32[144,128]{1,0:T(1,128)}', space=vmem, size = 0x12000, scoped, tag = 'internal scratch']
  %s0 = inlined_call_operand.vmem [shape: bf16[32,196], index: 0, kind: input, shape index: {}]
  %s1 = inlined_call_operand.vmem [shape: bf16[196,32], index: 1, kind: input, shape index: {}]
  %s2 = inlined_call_operand.vmem [shape: f32[1,32], index: 2, kind: input, shape index: {}]
  %s3 = inlined_call_operand.hbm [shape: f32[32,32], index: 3, kind: output, shape index: {}]
  %s4 = sld [smem:[#allocation0]]
  $region22: #{_patch_embed_core.1} parent=0
    _
  %s6 = ssub.s32 1, %s4
  %s7 = scalar_select 0, %s6, %s4
  $region1: #{_patch_embed_core.1} parent=0
    #allocation2 [shape = 'u8[16384]{0}', space=vmem, size = 0x4000, scoped, tag = 'output window, operand 0, single buffered']
    #allocation3 [shape = 's32[1]{0}', space=sflag, size = 0x4, scoped, tag = 'scoped memory for _patch_embed_core.1']
    %8 = vsyncpa [#allocation3], 0
    // Predicated region
    $region2: #{_patch_embed_core.1} parent=1 // pred_check
      _
    $region3: #{_patch_embed_core.1} parent=1 // pred_check_branch
      %10 = sbr.rel (0) target = $region5
    $region4: #{_patch_embed_core.1} parent=1 // pred_region
      _
    $region5: #{_patch_embed_core.1} parent=1 // pred_fallthru
      _
    // Predicated region
    $region6: #{_patch_embed_core.1} parent=1 // pred_check
      _
    $region7: #{_patch_embed_core.1} parent=1 // pred_check_branch
      %12 = sbr.rel (0) target = $region9
    $region8: #{_patch_embed_core.1} parent=1 // pred_region
      _
    $region9: #{_patch_embed_core.1} parent=1 // pred_fallthru
      _
    // Predicated region
    $region10: #{_patch_embed_core.1} parent=1 // pred_check
      _
    $region11: #{_patch_embed_core.1} parent=1 // pred_check_branch
      %14 = sbr.rel (0) target = $region13
    $region12: #{_patch_embed_core.1} parent=1 // pred_region
      _
    $region13: #{_patch_embed_core.1} parent=1 // pred_fallthru
      _
    %v16 = vld [vmem:[%s0] sm:$0xff]
    %v17 = vld [vmem:[%s0 + $0x8] sm:$0xff]
    %v18 = vld [vmem:[%s0 + $0x10] sm:$0xff]
    %v19 = vld [vmem:[%s0 + $0x18] sm:$0xff]
    %v20 = vld [vmem:[%s1] sm:$0xf]
    %v21 = vld [vmem:[%s1 + $0x4] sm:$0xf]
    %v22 = vld [vmem:[%s1 + $0x8] sm:$0xf]
    %v23 = vld [vmem:[%s1 + $0xc] sm:$0xf]
    %v24 = vld [vmem:[%s1 + $0x10] sm:$0xf]
    %v25 = vld [vmem:[%s1 + $0x14] sm:$0xf]
    %v26 = vld [vmem:[%s1 + $0x18] sm:$0xf]
    %v27 = vld [vmem:[%s1 + $0x1c] sm:$0xf]
    %v28 = vld [vmem:[%s1 + $0x20] sm:$0xf]
    %v29 = vld [vmem:[%s1 + $0x24] sm:$0xf]
    %v30 = vld [vmem:[%s1 + $0x28] sm:$0xf]
    %v31 = vld [vmem:[%s1 + $0x2c] sm:$0xf]
    %v32 = vld [vmem:[%s1 + $0x30] sm:$0xf]
    %v33 = vld [vmem:[%s1 + $0x34] sm:$0xf]
    %v34 = vld [vmem:[%s1 + $0x38] sm:$0xf]
    %v35 = vld [vmem:[%s1 + $0x3c] sm:$0xf]
    %v36 = vld [vmem:[%s1 + $0x40] sm:$0xf]
    %v37 = vld [vmem:[%s1 + $0x44] sm:$0xf]
    %v38 = vld [vmem:[%s1 + $0x48] sm:$0xf]
    %v39 = vld [vmem:[%s1 + $0x4c] sm:$0xf]
    %v40 = vld [vmem:[%s1 + $0x50] sm:$0xf]
    %v41 = vld [vmem:[%s1 + $0x54] sm:$0xf]
    %v42 = vld [vmem:[%s1 + $0x58] sm:$0xf]
    %v43 = vld [vmem:[%s1 + $0x5c] sm:$0xf]
    %v44 = vld [vmem:[%s1 + $0x60] sm:$0x3]
    %v45 = vld [vmem:[%s2] sm:$0x1]
    %v47 = vlaneseq
    %v48 = vshrl.u32 %v47, 7
    %v49 = vsub.s32 0, %v48
    %v50 = vrot.slane %v45, %v49
    %v56 = vunpack.c.l.b16 %v16
    %v57 = vunpack.c.h.b16 %v16
    %v58 = vunpack.c.l.b16 %v17
    %v59 = vunpack.c.h.b16 %v17
    %v60 = vunpack.c.l.b16 %v18
    %v61 = vunpack.c.h.b16 %v18
    %v62 = vunpack.c.l.b16 %v19
    %v63 = vunpack.c.h.b16 %v19
    %v64 = vpack.c.b16 %v58, %v56
    %v65 = vpack.c.b16 %v59, %v57
    %v66 = vpack.c.b16 %v62, %v60
    %v67 = vpack.c.b16 %v63, %v61
    %v95 = vunpack.c.l.b16 %v20
    %v96 = vunpack.c.l.b16 %v21
    %v97 = vunpack.c.l.b16 %v22
    %v98 = vunpack.c.l.b16 %v23
    %v99 = vunpack.c.l.b16 %v24
    %v100 = vunpack.c.l.b16 %v25
    %v101 = vunpack.c.l.b16 %v26
    %v102 = vunpack.c.l.b16 %v27
    %v103 = vunpack.c.l.b16 %v28
    %v104 = vunpack.c.l.b16 %v29
    %v105 = vunpack.c.l.b16 %v30
    %v106 = vunpack.c.l.b16 %v31
    %v107 = vunpack.c.l.b16 %v32
    %v108 = vunpack.c.l.b16 %v33
    %v109 = vunpack.c.l.b16 %v34
    %v110 = vunpack.c.l.b16 %v35
    %v111 = vunpack.c.l.b16 %v36
    %v112 = vunpack.c.l.b16 %v37
    %v113 = vunpack.c.l.b16 %v38
    %v114 = vunpack.c.l.b16 %v39
    %v115 = vunpack.c.l.b16 %v40
    %v116 = vunpack.c.l.b16 %v41
    %v117 = vunpack.c.l.b16 %v42
    %v118 = vunpack.c.l.b16 %v43
    %v119 = vunpack.c.l.b16 %v44
    %v120 = vpack.c.b16 %v96, %v95
    %v121 = vpack.c.b16 %v98, %v97
    %v122 = vpack.c.b16 %v100, %v99
    %v123 = vpack.c.b16 %v102, %v101
    %v124 = vpack.c.b16 %v104, %v103
    %v125 = vpack.c.b16 %v106, %v105
    %v126 = vpack.c.b16 %v108, %v107
    %v127 = vpack.c.b16 %v110, %v109
    %v128 = vpack.c.b16 %v112, %v111
    %v129 = vpack.c.b16 %v114, %v113
    %v130 = vpack.c.b16 %v116, %v115
    %v131 = vpack.c.b16 %v118, %v117
    %v132 = vpack.c.b16 %v119, %v119
    %vm145 = vcmask 556032
    %v147 = vsel %vm145, %v65, 0
    %v150 = vsel %vm145, %v67, 0
    %vm152 = vcmask 1041408
    %v154 = vsel %vm152, %v132, 0
    %156 = vmatprep.subr.bf16.mxu0 0
    %157 = vmatpush1.bf16.msra.mxu0 %v120
    %158 = vmatprep.subr.bf16.mxu0 0
    %159 = vmatpush1.bf16.msra.mxu0 %v121
    %160 = vmatprep.subr.bf16.mxu0 0
    %161 = vmatpush1.bf16.msra.mxu0 %v122
    %162 = vmatprep.subr.bf16.mxu0 0
    %163 = vmatpush1.bf16.msra.mxu0 %v123
    %164 = vmatprep.subr.bf16.mxu0 0
    %165 = vmatpush1.bf16.msra.mxu0 %v124
    %166 = vmatprep.subr.bf16.mxu0 0
    %167 = vmatpush1.bf16.msra.mxu0 %v125
    %168 = vmatprep.subr.bf16.mxu0 0
    %169 = vmatpush1.bf16.msra.mxu0 %v126
    %170 = vmatprep.subr.bf16.mxu0 0
    %171 = vmatpush1.bf16.msra.mxu0 %v127
    %172 = vmatprep.subr.bf16.mxu0 0
    %173 = vmatpush1.bf16.msra.mxu0 %v128
    %174 = vmatprep.subr.bf16.mxu0 0
    %175 = vmatpush1.bf16.msra.mxu0 %v129
    %176 = vmatprep.subr.bf16.mxu0 0
    %177 = vmatpush1.bf16.msra.mxu0 %v130
    %178 = vmatprep.subr.bf16.mxu0 0
    %179 = vmatpush1.bf16.msra.mxu0 %v131
    %180 = vmatprep.subr.bf16.mxu0 0
    %181 = vmatpush1.bf16.msra.mxu0 %v154
    %182 = vmatprep.subr.bf16.mxu0 0
    %183 = vmatpush1.bf16.msra.mxu0 0
    %184 = vmatprep.subr.bf16.mxu0 0
    %185 = vmatpush1.bf16.msra.mxu0 0
    %186 = vmatprep.subr.bf16.mxu0 0
    %187 = vmatpush1.bf16.msra.mxu0 0
    %188 = vmatprep.mubr.bf16.mxu0 %v147
    %189 = vmatmul.mubr.bf16.gmra.mrb[0].mxu0 %v64
    %v190 = vpop.f32.mrb[0].mxu0
    %v191 = vadd.f32 %v50, %v190
    %v192 = vpop.f32.mrb[0].mxu0
    %v193 = vpop.f32.mrb[0].mxu0
    %v194 = vadd.f32 %v50, %v193
    %v195 = vpop.f32.mrb[0].mxu0
    %196 = vmatprep.mubr.bf16.mxu0 %v150
    %197 = vmatmul.mubr.bf16.gmra.mrb[0].mxu0 %v66
    %v198 = vpop.f32.mrb[0].mxu0
    %v199 = vadd.f32 %v50, %v198
    %v200 = vpop.f32.mrb[0].mxu0
    %v201 = vpop.f32.mrb[0].mxu0
    %v202 = vadd.f32 %v50, %v201
    %v203 = vpop.f32.mrb[0].mxu0
    %204 = vdwg.mxu0
    %vm205 = vcmask 261120
    %206 = vst.msk [vmem:[#allocation2] sm:$0xff] %vm205, %v191
    %207 = vst.msk [vmem:[#allocation2 + $0x8] sm:$0xff] %vm205, %v194
    %208 = vst.msk [vmem:[#allocation2 + $0x10] sm:$0xff] %vm205, %v199
    %209 = vst.msk [vmem:[#allocation2 + $0x18] sm:$0xff] %vm205, %v202
    // Predicated region
    $region14: #{_patch_embed_core.1} parent=1 // pred_check
      _
    $region15: #{_patch_embed_core.1} parent=1 // pred_check_branch
      %211 = sbr.rel (0) target = $region17
    $region16: #{_patch_embed_core.1} parent=1 // pred_region
      %s213 = ssub.s32 512, 512
      %214 = vsyncadd [#allocation3], %s213
      %s215 = sshll.u32 [#allocation2], 4
      %s216 = int_to_ptr.vmem [resolvable:$true] %s215
      %221 = dma.vmem_to_hbm [thread:$0]  %s216, 512, %s3, [#allocation3], 128, 128, 8
    $region17: #{_patch_embed_core.1} parent=1 // pred_fallthru
      _
    // Predicated region
    $region18: #{_patch_embed_core.1} parent=1 // pred_check
      _
    $region19: #{_patch_embed_core.1} parent=1 // pred_check_branch
      %223 = sbr.rel (0) target = $region21
    $region20: #{_patch_embed_core.1} parent=1 // pred_region
      %224 = dma.done [#allocation3], 512
    $region21: #{_patch_embed_core.1} parent=1 // pred_fallthru
      _
    %225 = vsyncpa [#allocation3], 1

</llo_original>
